<compile_context>
chip_gen: v6e
topology: v6e:2x2x1
jax: 0.10.0
libtpu: 0.0.40
codegen_flags: <defaults>
</compile_context>

<pallas_src>
import functools

import jax
import jax.numpy as jnp
from jax import lax
from jax.experimental import pallas as pl
from jax.experimental.pallas import tpu as pltpu

EPSILON = 1e-10


def _csc_loss_kernel(*refs, change_temperature, threshold):
    if change_temperature:
        vf_ref, svf_ref, tcol_ref, trow_ref, cos_ref, out_ref = refs
    else:
        vf_ref, svf_ref, tcol_ref, trow_ref, out_ref = refs
        cos_ref = None

    vf = vf_ref[...].astype(jnp.float32)     # (TR, D) row tile
    svf = svf_ref[...].astype(jnp.float32)   # (N, D), already L2-normalized

    # F.normalize(video_feature, dim=1): x / clamp_min(||x||_2, 1e-12)
    sq = jnp.sum(vf * vf, axis=-1, keepdims=True)
    inv_norm = 1.0 / jnp.maximum(jnp.sqrt(sq), 1e-12)
    vfn = vf * inv_norm

    # (TR, N) tile of video_feature @ selected_video_feature.T on the MXU.
    sim = lax.dot_general(
        vfn, svf,
        dimension_numbers=(((1,), (1,)), ((), ())),
        preferred_element_type=jnp.float32)

    # label_mask[i, j] = float(targets[i] == targets[j])  (int32 compare)
    label_mask = (tcol_ref[...] == trow_ref[...]).astype(jnp.float32)

    if change_temperature:
        temp = cos_ref[...].astype(jnp.float32) + threshold
        logits = sim / temp
    else:
        logits = sim * (1.0 / threshold)     # compile-time scalar reciprocal

    # softmax over the last dim
    m = jnp.max(logits, axis=-1, keepdims=True)
    e = jnp.exp(logits - m)
    denom = jnp.sum(e, axis=-1, keepdims=True)
    p = e * (1.0 / denom)                    # one reciprocal per row, N^2 VPU muls

    per_row = jnp.sum(-jnp.log(p + EPSILON) * label_mask, axis=-1, keepdims=True)
    per_row = per_row / jnp.sum(label_mask, axis=-1, keepdims=True)
    out_ref[...] = per_row                   # (TR, 1) per-row losses


def _pick_row_tile(n):
    """Row-tile size: multiple of 8, chosen so ~8 live (TR, N) f32 slabs stay
    around 24 MiB (comfortable on v7x's 64 MiB VMEM, trivial on v5e/v6e)."""
    if n <= 128:
        return ((n + 7) // 8) * 8
    budget_rows = (24 * 1024 * 1024) // (8 * 4 * n)
    tr = max(8, min(512, budget_rows, n))
    return (tr // 8) * 8


def csc_loss(video_feature, selected_video_feature, targets, cos_similarity=None,
             change_temperature=False, threshold=0.07):
    n, d = video_feature.shape
    tr = _pick_row_tile(n)
    n_pad = ((n + tr - 1) // tr) * tr
    pad = n_pad - n

    vf = video_feature
    if pad:
        vf = jnp.pad(vf, ((0, pad), (0, 0)))

    # Normalize the resident operand once (kernel would redo it per row tile).
    svf = selected_video_feature.astype(jnp.float32)
    svf = svf / jnp.maximum(
        jnp.sqrt(jnp.sum(svf * svf, axis=1, keepdims=True)), 1e-12)

    t = targets.astype(jnp.int32)
    t_col = t.reshape(n, 1)
    if pad:
        t_col = jnp.pad(t_col, ((0, pad), (0, 0)), constant_values=-1)
    t_row = t.reshape(1, n)

    in_specs = [
        pl.BlockSpec((tr, d), lambda i: (i, 0)),    # vf row tile
        pl.BlockSpec((n, d), lambda i: (0, 0)),     # normalized svf, resident
        pl.BlockSpec((tr, 1), lambda i: (i, 0)),    # targets (column form)
        pl.BlockSpec((1, n), lambda i: (0, 0)),     # targets (row form), resident
    ]
    args = [vf, svf, t_col, t_row]
    if change_temperature:
        cs = cos_similarity
        if pad:
            cs = jnp.pad(cs, ((0, pad), (0, 0)))
        in_specs.append(pl.BlockSpec((tr, n), lambda i: (i, 0)))
        args.append(cs)

    kernel = functools.partial(
        _csc_loss_kernel,
        change_temperature=bool(change_temperature),
        threshold=float(threshold))

    per_row = pl.pallas_call(
        kernel,
        grid=(n_pad // tr,),
        out_shape=jax.ShapeDtypeStruct((n_pad, 1), jnp.float32),
        in_specs=in_specs,
        out_specs=pl.BlockSpec((tr, 1), lambda i: (i, 0)),
        compiler_params=pltpu.CompilerParams(
            dimension_semantics=("parallel",),
            vmem_limit_bytes=48 * 1024 * 1024),
    )(*args)

    # Padded rows (if any) hold garbage/NaN; slice them off before the mean.
    return jnp.mean(per_row[:n, 0])


def _csc_loss_ref(video_feature, selected_video_feature, targets,
                  cos_similarity, change_temperature=False, threshold=0.07):
    # pure-JAX reference mirroring the PyTorch module
    vf = video_feature / jnp.maximum(
        jnp.linalg.norm(video_feature, axis=1, keepdims=True), 1e-12)
    svf = selected_video_feature / jnp.maximum(
        jnp.linalg.norm(selected_video_feature, axis=1, keepdims=True), 1e-12)
    label_mask = (targets[:, None] == targets[None, :]).astype(jnp.float32)
    sim = vf @ svf.T
    temp = (cos_similarity + threshold) if change_temperature else threshold
    p = jax.nn.softmax(sim / temp, axis=-1)
    per_row = jnp.sum(-jnp.log(p + EPSILON) * label_mask, axis=-1)
    per_row = per_row / jnp.sum(label_mask, axis=1)
    return jnp.mean(per_row)


if __name__ == "__main__":
    key = jax.random.PRNGKey(0)

    ok = True
    for (N, D) in ((8, 32), (13, 32)):   # second shape exercises row padding
        k1, k2, k3, k4, key = jax.random.split(key, 5)
        video_feature = jax.random.normal(k1, (N, D), dtype=jnp.float32)
        selected_video_feature = jax.random.normal(k2, (N, D), dtype=jnp.float32)
        targets = jax.random.randint(k3, (N,), 0, 3, dtype=jnp.int32)
        cos_similarity = jax.random.uniform(k4, (N, N), dtype=jnp.float32,
                                            minval=-1.0, maxval=1.0)

        for change_temp in (False, True):
            out = csc_loss(video_feature, selected_video_feature, targets,
                           cos_similarity, change_temperature=change_temp)
            out = jax.block_until_ready(out)
            ref = _csc_loss_ref(video_feature, selected_video_feature, targets,
                                cos_similarity, change_temperature=change_temp)
            if not bool(jnp.allclose(out, ref, rtol=1e-4, atol=1e-4)):
                ok = False

    if ok:
        print("KERNEL_OK")
</pallas_src>

<mosaic_0001>
module attributes {stable_mosaic.version = 11 : i64} {
  func.func @_csc_loss_kernel(%arg0: i32, %arg1: memref<8x32xf32, #tpu.memory_space<vmem>>, %arg2: memref<8x32xf32, #tpu.memory_space<vmem>>, %arg3: memref<8x1xi32, #tpu.memory_space<vmem>>, %arg4: memref<1x8xi32, #tpu.memory_space<vmem>>, %arg5: memref<8x1xf32, #tpu.memory_space<vmem>>) attributes {dimension_semantics = [#tpu.dimension_semantics<parallel>], iteration_bounds = array<i64: 1>, scalar_prefetch = 0 : i64, scratch_operands = 0 : i64, tpu.core_type = #tpu.core_type<tc>, window_params = [{transform_indices = @transform_0, window_bounds = array<i64: 8, 32>}, {pipeline_mode = #tpu.pipeline_mode<synchronous>, transform_indices = @transform_1, window_bounds = array<i64: 8, 32>}, {transform_indices = @transform_2, window_bounds = array<i64: 8, 1>}, {pipeline_mode = #tpu.pipeline_mode<synchronous>, transform_indices = @transform_3, window_bounds = array<i64: 1, 8>}, {transform_indices = @transform_4, window_bounds = array<i64: 8, 1>}]} {
    %c0 = arith.constant 0 : index
    %c0_0 = arith.constant 0 : index
    %0 = vector.load %arg1[%c0, %c0_0] : memref<8x32xf32, #tpu.memory_space<vmem>>, vector<8x32xf32>
    %c0_1 = arith.constant 0 : index
    %c0_2 = arith.constant 0 : index
    %1 = vector.load %arg2[%c0_1, %c0_2] : memref<8x32xf32, #tpu.memory_space<vmem>>, vector<8x32xf32>
    %2 = arith.mulf %0, %0 : vector<8x32xf32>
    %cst = arith.constant dense<0.000000e+00> : vector<8xf32>
    %3 = vector.multi_reduction <add>, %2, %cst [1] : vector<8x32xf32> to vector<8xf32>
    %4 = vector.shape_cast %3 : vector<8xf32> to vector<8x1xf32>
    %5 = math.sqrt %4 : vector<8x1xf32>
    %cst_3 = arith.constant 9.99999996E-13 : f32
    %6 = vector.broadcast %cst_3 : f32 to vector<8x1xf32>
    %7 = arith.maximumf %5, %6 : vector<8x1xf32>
    %cst_4 = arith.constant 1.000000e+00 : f32
    %8 = vector.broadcast %cst_4 : f32 to vector<8x1xf32>
    %9 = arith.divf %8, %7 : vector<8x1xf32>
    %10 = vector.broadcast %9 : vector<8x1xf32> to vector<8x32xf32>
    %11 = arith.mulf %0, %10 : vector<8x32xf32>
    %cst_5 = arith.constant dense<0.000000e+00> : vector<8x8xf32>
    %12 = tpu.matmul %11, %1, %cst_5 {dimension_numbers = #tpu.dot_dimension_numbers<[1], [1], [0], [0], [0, 0, 1, 0], [], []>} : vector<8x32xf32>, vector<8x32xf32>, vector<8x8xf32> -> vector<8x8xf32>
    %c0_6 = arith.constant 0 : index
    %c0_7 = arith.constant 0 : index
    %13 = vector.load %arg3[%c0_6, %c0_7] : memref<8x1xi32, #tpu.memory_space<vmem>>, vector<8x1xi32>
    %c0_8 = arith.constant 0 : index
    %c0_9 = arith.constant 0 : index
    %14 = vector.load %arg4[%c0_8, %c0_9] : memref<1x8xi32, #tpu.memory_space<vmem>>, vector<1x8xi32>
    %15 = vector.broadcast %13 : vector<8x1xi32> to vector<8x8xi32>
    %16 = vector.broadcast %14 : vector<1x8xi32> to vector<8x8xi32>
    %17 = arith.cmpi eq, %15, %16 : vector<8x8xi32>
    %18 = arith.extui %17 : vector<8x8xi1> to vector<8x8xi32>
    %19 = arith.sitofp %18 : vector<8x8xi32> to vector<8x8xf32>
    %cst_10 = arith.constant 14.2857141 : f32
    %20 = vector.broadcast %cst_10 : f32 to vector<8x8xf32>
    %21 = arith.mulf %12, %20 : vector<8x8xf32>
    %cst_11 = arith.constant dense<0xFF800000> : vector<8xf32>
    %22 = vector.multi_reduction <maximumf>, %21, %cst_11 [1] : vector<8x8xf32> to vector<8xf32>
    %23 = vector.shape_cast %22 : vector<8xf32> to vector<8x1xf32>
    %24 = vector.broadcast %23 : vector<8x1xf32> to vector<8x8xf32>
    %25 = arith.subf %21, %24 : vector<8x8xf32>
    %26 = math.exp %25 : vector<8x8xf32>
    %cst_12 = arith.constant dense<0.000000e+00> : vector<8xf32>
    %27 = vector.multi_reduction <add>, %26, %cst_12 [1] : vector<8x8xf32> to vector<8xf32>
    %28 = vector.shape_cast %27 : vector<8xf32> to vector<8x1xf32>
    %cst_13 = arith.constant 1.000000e+00 : f32
    %29 = vector.broadcast %cst_13 : f32 to vector<8x1xf32>
    %30 = arith.divf %29, %28 : vector<8x1xf32>
    %31 = vector.broadcast %30 : vector<8x1xf32> to vector<8x8xf32>
    %32 = arith.mulf %26, %31 : vector<8x8xf32>
    %cst_14 = arith.constant 1.000000e-10 : f32
    %33 = vector.broadcast %cst_14 : f32 to vector<8x8xf32>
    %34 = arith.addf %32, %33 : vector<8x8xf32>
    %35 = math.log %34 : vector<8x8xf32>
    %cst_15 = arith.constant 0.000000e+00 : f32
    %36 = vector.broadcast %cst_15 : f32 to vector<8x8xf32>
    %37 = arith.subf %36, %35 : vector<8x8xf32>
    %38 = arith.mulf %37, %19 : vector<8x8xf32>
    %cst_16 = arith.constant dense<0.000000e+00> : vector<8xf32>
    %39 = vector.multi_reduction <add>, %38, %cst_16 [1] : vector<8x8xf32> to vector<8xf32>
    %40 = vector.shape_cast %39 : vector<8xf32> to vector<8x1xf32>
    %cst_17 = arith.constant dense<0.000000e+00> : vector<8xf32>
    %41 = vector.multi_reduction <add>, %19, %cst_17 [1] : vector<8x8xf32> to vector<8xf32>
    %42 = vector.shape_cast %41 : vector<8xf32> to vector<8x1xf32>
    %43 = arith.divf %40, %42 : vector<8x1xf32>
    %c0_18 = arith.constant 0 : index
    %c0_19 = arith.constant 0 : index
    %44 = vector.load %arg5[%c0_18, %c0_19] : memref<8x1xf32, #tpu.memory_space<vmem>>, vector<8x1xf32>
    tpu.vector_store %arg5[%c0_18, %c0_19], %43 {strides = array<i32>} : memref<8x1xf32, #tpu.memory_space<vmem>>, vector<8x1xf32>,
    return
  }
  func.func @transform_0(%arg0: i32) -> (i32, i32) {
    %c0_i32 = arith.constant 0 : i32
    %c0_i32_0 = arith.constant 0 : i32
    return %arg0, %c0_i32 : i32, i32
  }
  func.func @transform_1(%arg0: i32) -> (i32, i32) {
    %c0_i32 = arith.constant 0 : i32
    %c0_i32_0 = arith.constant 0 : i32
    %c0_i32_1 = arith.constant 0 : i32
    return %c0_i32, %c0_i32_0 : i32, i32
  }
  func.func @transform_2(%arg0: i32) -> (i32, i32) {
    %c0_i32 = arith.constant 0 : i32
    %c0_i32_0 = arith.constant 0 : i32
    return %arg0, %c0_i32 : i32, i32
  }
  func.func @transform_3(%arg0: i32) -> (i32, i32) {
    %c0_i32 = arith.constant 0 : i32
    %c0_i32_0 = arith.constant 0 : i32
    %c0_i32_1 = arith.constant 0 : i32
    return %c0_i32, %c0_i32_0 : i32, i32
  }
  func.func @transform_4(%arg0: i32) -> (i32, i32) {
    %c0_i32 = arith.constant 0 : i32
    %c0_i32_0 = arith.constant 0 : i32
    return %arg0, %c0_i32 : i32, i32
  }
}

</mosaic_0001>

<llo_original>
// kernel: tpu_custom_call.1
$region0: #{tpu_custom_call.1}
  #allocation0 [shape = 'u32[]', space=smem, size = 0x4, offset = 0x4, fixed_abs, tag = 'smem constant byte address 0x4 - core index']
  #allocation1 [shape = 'u32[144,128]{1,0:T(1,128)}', space=vmem, size = 0x12000, scoped, tag = 'internal scratch']
  %s0 = inlined_call_operand.vmem [shape: f32[8,32], index: 0, kind: input, shape index: {}]
  %s1 = inlined_call_operand.hbm [shape: f32[8,32], index: 1, kind: input, shape index: {}]
  %s2 = inlined_call_operand.vmem [shape: s32[8,1], index: 2, kind: input, shape index: {}]
  %s3 = inlined_call_operand.vmem [shape: s32[1,8], index: 3, kind: input, shape index: {}]
  %s4 = inlined_call_operand.vmem [shape: f32[8,1], index: 4, kind: output, shape index: {}]
  %s5 = sld [smem:[#allocation0]]
  $region30: #{tpu_custom_call.1} parent=0
    _
  %s7 = ssub.s32 1, %s5
  %s8 = scalar_select 0, %s7, %s5
  $region1: #{tpu_custom_call.1} parent=0
    #allocation2 [shape = 'u8[4096]{0}', space=vmem, size = 0x1000, scoped, tag = 'input window, operand 1, single buffered']
    #allocation3 [shape = 's32[1]{0}', space=sflag, size = 0x4, scoped, tag = 'scoped memory for tpu_custom_call.1']
    %9 = vsyncpa [#allocation3], 0
    // Predicated region
    $region2: #{tpu_custom_call.1} parent=1 // pred_check
      _
    $region3: #{tpu_custom_call.1} parent=1 // pred_check_branch
      %11 = sbr.rel (0) target = $region5
    $region4: #{tpu_custom_call.1} parent=1 // pred_region
      _
    $region5: #{tpu_custom_call.1} parent=1 // pred_fallthru
      _
    // Predicated region
    $region6: #{tpu_custom_call.1} parent=1 // pred_check
      _
    $region7: #{tpu_custom_call.1} parent=1 // pred_check_branch
      %13 = sbr.rel (0) target = $region9
    $region8: #{tpu_custom_call.1} parent=1 // pred_region
      %s15 = ssub.s32 128, 128
      %16 = vsyncadd [#allocation3], %s15
      %s18 = sshll.u32 [#allocation2], 4
      %s19 = int_to_ptr.vmem [resolvable:$true] %s18
      %21 = dma.hbm_to_vmem [thread:$0]  %s1, 128, %s19, [#allocation3]
    $region9: #{tpu_custom_call.1} parent=1 // pred_fallthru
      _
    // Predicated region
    $region10: #{tpu_custom_call.1} parent=1 // pred_check
      _
    $region11: #{tpu_custom_call.1} parent=1 // pred_check_branch
      %23 = sbr.rel (0) target = $region13
    $region12: #{tpu_custom_call.1} parent=1 // pred_region
      _
    $region13: #{tpu_custom_call.1} parent=1 // pred_fallthru
      _
    // Predicated region
    $region14: #{tpu_custom_call.1} parent=1 // pred_check
      _
    $region15: #{tpu_custom_call.1} parent=1 // pred_check_branch
      %25 = sbr.rel (0) target = $region17
    $region16: #{tpu_custom_call.1} parent=1 // pred_region
      _
    $region17: #{tpu_custom_call.1} parent=1 // pred_fallthru
      _
    // Predicated region
    $region18: #{tpu_custom_call.1} parent=1 // pred_check
      _
    $region19: #{tpu_custom_call.1} parent=1 // pred_check_branch
      %27 = sbr.rel (0) target = $region21
    $region20: #{tpu_custom_call.1} parent=1 // pred_region
      %28 = dma.done [#allocation3], 128
    $region21: #{tpu_custom_call.1} parent=1 // pred_fallthru
      _
    %v29 = vld [vmem:[%s0] sm:$0xff]
    %v30 = vld [vmem:[#allocation2] sm:$0xff]
    %v31 = vmul.f32 %v29, %v29
    %vm32 = vcmask 261120
    %v33 = vsel %vm32, %v31, 0.0
    %34 = vadd.xlane.f32.xlu0 %v33
    %v35 = vpop.xlane.xlu0 %34
    %v36 = vrsqrt.pop %v35
    %v37 = vmul.f32 %v35, %v36
    %vm38 = vcmp.eq.f32.partialorder %v35, inf
    %v39 = vsel %vm38, %v35, %v37
    %vm40 = vcmp.eq.f32.partialorder %v35, 0.0
    %v41 = vand.u32 %v35, 2147483648
    %v42 = vsel %vm40, %v41, %v39
    %v43 = vmax.f32 %v42, 1e-12
    %v44 = vrcp.pop %v43
    %v45 = vmul.f32 1.0, %v44
    %v46 = vmul.f32 %v29, %v45
    %v48 = vsel %vm32, %v46, 0
    %v51 = vsel %vm32, %v30, 0
    %53 = vmatprep.subr.mxu0 0.0
    %54 = vmatpush1.xpose.msra.mxu0 0.0
    %55 = vmatprep.subr.mxu0 0.0
    %56 = vmatpush1.xpose.msra.mxu0 0.0
    %57 = vmatprep.subr.mxu0 0.0
    %58 = vmatpush1.xpose.msra.mxu0 0.0
    %59 = vmatprep.subr.mxu0 0.0
    %60 = vmatpush1.xpose.msra.mxu0 0.0
    %61 = vmatprep.subr.mxu0 0.0
    %62 = vmatpush1.xpose.msra.mxu0 0.0
    %63 = vmatprep.subr.mxu0 0.0
    %64 = vmatpush1.xpose.msra.mxu0 0.0
    %65 = vmatprep.subr.mxu0 0.0
    %66 = vmatpush1.xpose.msra.mxu0 0.0
    %67 = vmatprep.subr.mxu0 0.0
    %68 = vmatpush1.xpose.msra.mxu0 0.0
    %69 = vmatprep.subr.mxu0 0.0
    %70 = vmatpush1.xpose.msra.mxu0 0.0
    %71 = vmatprep.subr.mxu0 0.0
    %72 = vmatpush1.xpose.msra.mxu0 0.0
    %73 = vmatprep.subr.mxu0 0.0
    %74 = vmatpush1.xpose.msra.mxu0 0.0
    %75 = vmatprep.subr.mxu0 0.0
    %76 = vmatpush1.xpose.msra.mxu0 0.0
    %77 = vmatprep.subr.mxu0 0.0
    %78 = vmatpush1.xpose.msra.mxu0 0.0
    %79 = vmatprep.subr.mxu0 0.0
    %80 = vmatpush1.xpose.msra.mxu0 0.0
    %81 = vmatprep.subr.mxu0 0.0
    %82 = vmatpush1.xpose.msra.mxu0 0.0
    %83 = vmatprep.subr.mxu0 0.0
    %84 = vmatpush1.xpose.msra.mxu0 %v51
    %85 = vmatprep.subr.mxu0 0.0
    %86 = vmatpush2.xpose.msra.mxu0 0.0
    %87 = vmatprep.subr.mxu0 0.0
    %88 = vmatpush2.xpose.msra.mxu0 0.0
    %89 = vmatprep.subr.mxu0 0.0
    %90 = vmatpush2.xpose.msra.mxu0 0.0
    %91 = vmatprep.subr.mxu0 0.0
    %92 = vmatpush2.xpose.msra.mxu0 0.0
    %93 = vmatprep.subr.mxu0 0.0
    %94 = vmatpush2.xpose.msra.mxu0 0.0
    %95 = vmatprep.subr.mxu0 0.0
    %96 = vmatpush2.xpose.msra.mxu0 0.0
    %97 = vmatprep.subr.mxu0 0.0
    %98 = vmatpush2.xpose.msra.mxu0 0.0
    %99 = vmatprep.subr.mxu0 0.0
    %100 = vmatpush2.xpose.msra.mxu0 0.0
    %101 = vmatprep.subr.mxu0 0.0
    %102 = vmatpush2.xpose.msra.mxu0 0.0
    %103 = vmatprep.subr.mxu0 0.0
    %104 = vmatpush2.xpose.msra.mxu0 0.0
    %105 = vmatprep.subr.mxu0 0.0
    %106 = vmatpush2.xpose.msra.mxu0 0.0
    %107 = vmatprep.subr.mxu0 0.0
    %108 = vmatpush2.xpose.msra.mxu0 0.0
    %109 = vmatprep.subr.mxu0 0.0
    %110 = vmatpush2.xpose.msra.mxu0 0.0
    %111 = vmatprep.subr.mxu0 0.0
    %112 = vmatpush2.xpose.msra.mxu0 0.0
    %113 = vmatprep.subr.mxu0 0.0
    %114 = vmatpush2.xpose.msra.mxu0 0.0
    %115 = vmatprep.subr.mxu0 0.0
    %116 = vmatpush2.xpose.msra.mxu0 0.0
    %117 = vmatprep.mubr.f32.mxu0 0.0
    %118 = vmatmul.mubr.f32.gmra.mxu0 %v48
    %v119 = vpop.f32.mrf.mxu0
    %v120 = vadd.f32 0.0, %v119
    %v121 = vpop.f32.mrf.mxu0
    %122 = vdwg.mxu0
    %v123 = vld [vmem:[%s2] sm:$0xff]
    %v124 = vld [vmem:[%s3] sm:$0x1]
    %125 = vset.pattern.permute.xlu0 0
    %126 = vperm.xlu0 %125, %v123
    %v127 = vpop.permute.xlu0 %126
    %v128 = vlaneseq
    %v129 = vshrl.u32 %v128, 7
    %v130 = vsub.s32 0, %v129
    %v131 = vrot.slane %v124, %v130
    %vm132 = vcmp.eq.s32.totalorder %v127, %v131
    %v133 = vsel %vm132, 1, 0
    %v134 = vcvt.s32.f32 %v133
    %v135 = vmul.f32 %v120, 14.285714
    %vm136 = vcmask 64512
    %v137 = vsel %vm136, %v135, -inf
    %138 = vmax.xlane.f32.xlu0 %v137
    %v139 = vpop.xlane.xlu0 %138
    %v140 = vsub.f32 %v135, %v139
    %v141 = vmul.f32 %v140, 1.442695
    %v142 = vpow.pop %v141
    %v143 = vsel %vm136, %v142, 0.0
    %144 = vadd.xlane.f32.xlu0 %v143
    %v145 = vpop.xlane.xlu0 %144
    %v146 = vrcp.pop %v145
    %v147 = vmul.f32 1.0, %v146
    %v148 = vmul.f32 %v142, %v147
    %v149 = vadd.f32 %v148, 1e-10
    %v150 = vlog2.pop %v149
    %v151 = vmul.f32 %v150, 0.6931472
    %v152 = vsub.f32 0.0, %v151
    %v153 = vmul.f32 %v152, %v134
    %v154 = vsel %vm136, %v153, 0.0
    %155 = vadd.xlane.f32.xlu0 %v154
    %v156 = vpop.xlane.xlu0 %155
    %v157 = vsel %vm136, %v134, 0.0
    %158 = vadd.xlane.f32.xlu0 %v157
    %v159 = vpop.xlane.xlu0 %158
    %v160 = vrcp.pop %v159
    %v161 = vmul.f32 %v156, %v160
    %vm162 = vcmask 7168
    %163 = vst.msk [vmem:[%s4] sm:$0xff] %vm162, %v161
    // Predicated region
    $region22: #{tpu_custom_call.1} parent=1 // pred_check
      _
    $region23: #{tpu_custom_call.1} parent=1 // pred_check_branch
      %165 = sbr.rel (0) target = $region25
    $region24: #{tpu_custom_call.1} parent=1 // pred_region
      _
    $region25: #{tpu_custom_call.1} parent=1 // pred_fallthru
      _
    // Predicated region
    $region26: #{tpu_custom_call.1} parent=1 // pred_check
      _
    $region27: #{tpu_custom_call.1} parent=1 // pred_check_branch
      %167 = sbr.rel (0) target = $region29
    $region28: #{tpu_custom_call.1} parent=1 // pred_region
      _
    $region29: #{tpu_custom_call.1} parent=1 // pred_fallthru
      _
    %168 = vsyncpa [#allocation3], 1

</llo_original>
